<compile_context>
chip_gen: v6e
topology: v6e:2x2x1
jax: 0.10.0
libtpu: 0.0.40
codegen_flags: <defaults>
</compile_context>

<pallas_src>
import jax
import jax.numpy as jnp
from jax.experimental import pallas as pl
from jax.experimental.pallas import tpu as pltpu


def _poisson_gauss_kernel(x_ref, ht_ref, bias_ref, g_ref, o_ref):
    """One (row-block, column-tile) of the noisy measurements.

    x_ref    : (RB, N)  bf16 block of flattened images
    ht_ref   : (N, TN)  bf16 pre-scaled measurement columns ((alpha/2) * H^T)
    bias_ref : (1, TN)  f32  (alpha/2) * column-sums of H^T (folds the "+1")
    g_ref    : (RB, TN) f32  standard-normal noise
    o_ref    : (RB, TN) f32  noisy measurements
    """
    # y = (alpha/2) * (1 + x) @ H^T   ==  x @ ((alpha/2) H^T) + bias
    y = jnp.dot(x_ref[...], ht_ref[...], preferred_element_type=jnp.float32)
    y = y + bias_ref[...]
    # relu
    y = jnp.maximum(y, 0.0)
    # Gaussian-approximated Poisson noise: y + sqrt(y) * N(0,1)
    o_ref[...] = y + jnp.sqrt(y) * g_ref[...]


def _pick_col_tile(M, max_tn=512):
    """Largest column tile <= max_tn that is a multiple of 128 and divides M
    (falls back to the full extent M, which is always a legal block size)."""
    if M % 128 != 0 or M <= max_tn:
        return M
    tn = (max_tn // 128) * 128
    while M % tn != 0:
        tn -= 128
    return max(tn, 128)


def _pick_row_tile(rows, max_rb=256):
    """Full extent when small (always legal); otherwise a multiple-of-8 block."""
    if rows <= max_rb:
        return rows
    return max_rb


def poisson_approx_gauss(x_nchw, H, alpha, key, *, max_tn=512, max_rb=256):
    """x_nchw: (B, C, h, w) in [-1, 1].  H: (M, N) with N == h*w.

    Returns noisy measurements of shape (B, C, M), float32.
    """
    B, C, h, w = x_nchw.shape
    M, N = H.shape
    assert N == h * w

    rows = B * C
    x_flat = x_nchw.reshape(rows, N).astype(jnp.float32)     # glue: flatten NCHW

    # Fold the NoNoise pre-scale and alpha gain into the weights + a bias:
    #   (alpha/2) * (1 + x) @ H^T == x @ ((alpha/2) H^T) + (alpha/2) * rowsum(H)
    ht_scaled = (0.5 * float(alpha)) * jnp.transpose(H).astype(jnp.float32)  # (N, M)
    bias = jnp.sum(ht_scaled, axis=0, keepdims=True)                          # (1, M)

    # bf16 matmul operands (f32 accumulation inside the kernel).
    x_bf16 = x_flat.astype(jnp.bfloat16)
    ht_bf16 = ht_scaled.astype(jnp.bfloat16)

    # Standard-normal noise (equivalent of torch.randn_like), applied in-kernel.
    g = jax.random.normal(key, (rows, M), dtype=jnp.float32)

    rb = _pick_row_tile(rows, max_rb)
    tn = _pick_col_tile(M, max_tn)
    grid = (pl.cdiv(rows, rb), pl.cdiv(M, tn))

    out = pl.pallas_call(
        _poisson_gauss_kernel,
        out_shape=jax.ShapeDtypeStruct((rows, M), jnp.float32),
        grid=grid,
        in_specs=[
            pl.BlockSpec((rb, N), lambda i, j: (i, 0)),    # image row-block
            pl.BlockSpec((N, tn), lambda i, j: (0, j)),    # (alpha/2) H^T col tile
            pl.BlockSpec((1, tn), lambda i, j: (0, j)),    # bias col tile
            pl.BlockSpec((rb, tn), lambda i, j: (i, j)),   # noise tile
        ],
        out_specs=pl.BlockSpec((rb, tn), lambda i, j: (i, j)),
        compiler_params=pltpu.CompilerParams(
            dimension_semantics=("parallel", "parallel"),
        ),
    )(x_bf16, ht_bf16, bias, g)

    return out.reshape(B, C, M)


if __name__ == "__main__":
    # Small, deterministic setup consistent with the Linear meas-op example.
    B, C, h, w = 2, 4, 16, 16
    N = h * w            # 256 pixels
    M = 384              # number of measurements (multiple of 128 for clean tiling)
    alpha = 10.0

    key = jax.random.PRNGKey(0)
    k_x, k_h, k_g = jax.random.split(key, 3)
    x = jax.random.uniform(k_x, (B, C, h, w), jnp.float32, minval=-1.0, maxval=1.0)
    H = jax.random.uniform(k_h, (M, N), jnp.float32)   # Linear(H) with H ~ U[0,1)

    y = poisson_approx_gauss(x, H, alpha, k_g)
    y = jax.block_until_ready(y)

    assert y.shape == (B, C, M), y.shape
    assert bool(jnp.all(jnp.isfinite(y)))

    # Reference in plain f32 JAX with the same noise draw.
    x_flat = x.reshape(B * C, N)
    y_clean = jnp.maximum((0.5 * alpha) * (x_flat + 1.0) @ H.T, 0.0)
    g_ref = jax.random.normal(k_g, (B * C, M), dtype=jnp.float32)
    y_ref = (y_clean + jnp.sqrt(y_clean) * g_ref).reshape(B, C, M)

    # Kernel uses bf16 matmul operands with f32 accumulation -> small rel error.
    err = float(jnp.max(jnp.abs(y - y_ref) / (jnp.abs(y_ref) + 1.0)))
    assert err < 3e-2, err

    # Sanity: noise magnitude is ~ N(0,1) * sqrt(y_clean).
    rel = float(jnp.max(jnp.abs(y.reshape(B * C, M) - y_clean)
                        / (jnp.sqrt(y_clean) + 1.0)))
    assert rel < 8.0, rel

    print("KERNEL_OK")
</pallas_src>

<mosaic_0001>
module attributes {stable_mosaic.version = 11 : i64} {
  func.func @_poisson_gauss_kernel(%arg0: i32, %arg1: i32, %arg2: memref<8x256xbf16, #tpu.memory_space<vmem>>, %arg3: memref<256x384xbf16, #tpu.memory_space<vmem>>, %arg4: memref<1x384xf32, #tpu.memory_space<vmem>>, %arg5: memref<8x384xf32, #tpu.memory_space<vmem>>, %arg6: memref<8x384xf32, #tpu.memory_space<vmem>>) attributes {dimension_semantics = [#tpu.dimension_semantics<parallel>, #tpu.dimension_semantics<parallel>], iteration_bounds = array<i64: 1, 1>, scalar_prefetch = 0 : i64, scratch_operands = 0 : i64, tpu.core_type = #tpu.core_type<tc>, window_params = [{transform_indices = @transform_0, window_bounds = array<i64: 8, 256>}, {transform_indices = @transform_1, window_bounds = array<i64: 256, 384>}, {transform_indices = @transform_2, window_bounds = array<i64: 1, 384>}, {transform_indices = @transform_3, window_bounds = array<i64: 8, 384>}, {transform_indices = @transform_4, window_bounds = array<i64: 8, 384>}]} {
    %c0 = arith.constant 0 : index
    %c0_0 = arith.constant 0 : index
    %0 = vector.load %arg2[%c0, %c0_0] : memref<8x256xbf16, #tpu.memory_space<vmem>>, vector<8x256xbf16>
    %c0_1 = arith.constant 0 : index
    %c0_2 = arith.constant 0 : index
    %1 = vector.load %arg3[%c0_1, %c0_2] : memref<256x384xbf16, #tpu.memory_space<vmem>>, vector<256x384xbf16>
    %cst = arith.constant dense<0.000000e+00> : vector<8x384xf32>
    %2 = tpu.matmul %0, %1, %cst {dimension_numbers = #tpu.dot_dimension_numbers<[1], [0], [0], [1], [0, 0, 1, 1], [], []>} : vector<8x256xbf16>, vector<256x384xbf16>, vector<8x384xf32> -> vector<8x384xf32>
    %c0_3 = arith.constant 0 : index
    %c0_4 = arith.constant 0 : index
    %3 = vector.load %arg4[%c0_3, %c0_4] : memref<1x384xf32, #tpu.memory_space<vmem>>, vector<1x384xf32>
    %4 = vector.broadcast %3 : vector<1x384xf32> to vector<8x384xf32>
    %5 = arith.addf %2, %4 : vector<8x384xf32>
    %cst_5 = arith.constant 0.000000e+00 : f32
    %6 = vector.broadcast %cst_5 : f32 to vector<8x384xf32>
    %7 = arith.maximumf %5, %6 : vector<8x384xf32>
    %8 = math.sqrt %7 : vector<8x384xf32>
    %c0_6 = arith.constant 0 : index
    %c0_7 = arith.constant 0 : index
    %9 = vector.load %arg5[%c0_6, %c0_7] : memref<8x384xf32, #tpu.memory_space<vmem>>, vector<8x384xf32>
    %10 = arith.mulf %8, %9 : vector<8x384xf32>
    %11 = arith.addf %7, %10 : vector<8x384xf32>
    %c0_8 = arith.constant 0 : index
    %c0_9 = arith.constant 0 : index
    %12 = vector.load %arg6[%c0_8, %c0_9] : memref<8x384xf32, #tpu.memory_space<vmem>>, vector<8x384xf32>
    tpu.vector_store %arg6[%c0_8, %c0_9], %11 {strides = array<i32>} : memref<8x384xf32, #tpu.memory_space<vmem>>, vector<8x384xf32>,
    return
  }
  func.func @transform_0(%arg0: i32, %arg1: i32) -> (i32, i32) {
    %c0_i32 = arith.constant 0 : i32
    %c0_i32_0 = arith.constant 0 : i32
    return %arg0, %c0_i32 : i32, i32
  }
  func.func @transform_1(%arg0: i32, %arg1: i32) -> (i32, i32) {
    %c0_i32 = arith.constant 0 : i32
    %c0_i32_0 = arith.constant 0 : i32
    return %c0_i32, %arg1 : i32, i32
  }
  func.func @transform_2(%arg0: i32, %arg1: i32) -> (i32, i32) {
    %c0_i32 = arith.constant 0 : i32
    %c0_i32_0 = arith.constant 0 : i32
    return %c0_i32, %arg1 : i32, i32
  }
  func.func @transform_3(%arg0: i32, %arg1: i32) -> (i32, i32) {
    %c0_i32 = arith.constant 0 : i32
    return %arg0, %arg1 : i32, i32
  }
  func.func @transform_4(%arg0: i32, %arg1: i32) -> (i32, i32) {
    %c0_i32 = arith.constant 0 : i32
    return %arg0, %arg1 : i32, i32
  }
}

</mosaic_0001>

<llo_original>
// kernel: tpu_custom_call.1
$region0: #{tpu_custom_call.1}
  #allocation0 [shape = 'u32[]', space=smem, size = 0x4, offset = 0x4, fixed_abs, tag = 'smem constant byte address 0x4 - core index']
  #allocation1 [shape = 'u32[144,128]{1,0:T(1,128)}', space=vmem, size = 0x12000, scoped, tag = 'internal scratch']
  %s0 = inlined_call_operand.hbm [shape: bf16[8,256], index: 0, kind: input, shape index: {}]
  %s1 = inlined_call_operand.hbm [shape: bf16[256,384], index: 1, kind: input, shape index: {}]
  %s2 = inlined_call_operand.vmem [shape: f32[1,384], index: 2, kind: input, shape index: {}]
  %s3 = inlined_call_operand.hbm [shape: f32[8,384], index: 3, kind: input, shape index: {}]
  %s4 = inlined_call_operand.hbm [shape: f32[8,384], index: 4, kind: output, shape index: {}]
  %s5 = sld [smem:[#allocation0]]
  $region38: #{tpu_custom_call.1} parent=0
    _
  %s7 = ssub.s32 1, %s5
  %s8 = scalar_select 0, %s7, %s5
  $region1: #{tpu_custom_call.1} parent=0
    #allocation2 [shape = 'u8[4096]{0}', space=vmem, size = 0x1000, scoped, tag = 'input window, operand 0, single buffered']
    #allocation3 [shape = 's32[1]{0}', space=sflag, size = 0x4, scoped, tag = 'scoped memory for tpu_custom_call.1']
    #allocation4 [shape = 's32[1]{0}', space=sflag, size = 0x4, scoped, tag = 'scoped memory for tpu_custom_call.1']
    #allocation5 [shape = 'u8[196608]{0}', space=vmem, size = 0x30000, scoped, tag = 'input window, operand 1, single buffered']
    #allocation6 [shape = 's32[1]{0}', space=sflag, size = 0x4, scoped, tag = 'scoped memory for tpu_custom_call.1']
    #allocation7 [shape = 'u8[12288]{0}', space=vmem, size = 0x3000, scoped, tag = 'input window, operand 3, single buffered']
    #allocation8 [shape = 'u8[12288]{0}', space=vmem, size = 0x3000, scoped, tag = 'output window, operand 0, single buffered']
    %9 = vsyncpa [#allocation3], 0
    %10 = vsyncpa [#allocation6], 0
    %11 = vsyncpa [#allocation4], 0
    // Predicated region
    $region2: #{tpu_custom_call.1} parent=1 // pred_check
      _
    $region3: #{tpu_custom_call.1} parent=1 // pred_check_branch
      %13 = sbr.rel (0) target = $region5
    $region4: #{tpu_custom_call.1} parent=1 // pred_region
      %s15 = ssub.s32 128, 128
      %16 = vsyncadd [#allocation3], %s15
      %s18 = sshll.u32 [#allocation2], 4
      %s19 = int_to_ptr.vmem [resolvable:$true] %s18
      %21 = dma.hbm_to_vmem [thread:$0]  %s0, 128, %s19, [#allocation3]
    $region5: #{tpu_custom_call.1} parent=1 // pred_fallthru
      _
    // Predicated region
    $region6: #{tpu_custom_call.1} parent=1 // pred_check
      _
    $region7: #{tpu_custom_call.1} parent=1 // pred_check_branch
      %23 = sbr.rel (0) target = $region9
    $region8: #{tpu_custom_call.1} parent=1 // pred_region
      %s25 = ssub.s32 6144, 6144
      %26 = vsyncadd [#allocation6], %s25
      %s27 = sshll.u32 [#allocation5], 4
      %s28 = int_to_ptr.vmem [resolvable:$true] %s27
      %33 = dma.hbm_to_vmem [thread:$0]  %s1, 6144, %s28, [#allocation6], 192, 192, 12
    $region9: #{tpu_custom_call.1} parent=1 // pred_fallthru
      _
    // Predicated region
    $region10: #{tpu_custom_call.1} parent=1 // pred_check
      _
    $region11: #{tpu_custom_call.1} parent=1 // pred_check_branch
      %35 = sbr.rel (0) target = $region13
    $region12: #{tpu_custom_call.1} parent=1 // pred_region
      _
    $region13: #{tpu_custom_call.1} parent=1 // pred_fallthru
      _
    // Predicated region
    $region14: #{tpu_custom_call.1} parent=1 // pred_check
      _
    $region15: #{tpu_custom_call.1} parent=1 // pred_check_branch
      %37 = sbr.rel (0) target = $region17
    $region16: #{tpu_custom_call.1} parent=1 // pred_region
      %s39 = ssub.s32 384, 384
      %40 = vsyncadd [#allocation6], %s39
      %s42 = sshll.u32 [#allocation7], 4
      %s43 = int_to_ptr.vmem [resolvable:$true] %s42
      %45 = dma.hbm_to_vmem [thread:$0]  %s3, 384, %s43, [#allocation6]
    $region17: #{tpu_custom_call.1} parent=1 // pred_fallthru
      _
    // Predicated region
    $region18: #{tpu_custom_call.1} parent=1 // pred_check
      _
    $region19: #{tpu_custom_call.1} parent=1 // pred_check_branch
      %47 = sbr.rel (0) target = $region21
    $region20: #{tpu_custom_call.1} parent=1 // pred_region
      %48 = dma.done [#allocation3], 128
    $region21: #{tpu_custom_call.1} parent=1 // pred_fallthru
      _
    // Predicated region
    $region22: #{tpu_custom_call.1} parent=1 // pred_check
      _
    $region23: #{tpu_custom_call.1} parent=1 // pred_check_branch
      %50 = sbr.rel (0) target = $region25
    $region24: #{tpu_custom_call.1} parent=1 // pred_region
      %51 = dma.done [#allocation6], 6144
    $region25: #{tpu_custom_call.1} parent=1 // pred_fallthru
      _
    // Predicated region
    $region26: #{tpu_custom_call.1} parent=1 // pred_check
      _
    $region27: #{tpu_custom_call.1} parent=1 // pred_check_branch
      %53 = sbr.rel (0) target = $region29
    $region28: #{tpu_custom_call.1} parent=1 // pred_region
      %54 = dma.done [#allocation6], 384
    $region29: #{tpu_custom_call.1} parent=1 // pred_fallthru
      _
    %v56 = vld [vmem:[#allocation2] sm:$0xff]
    %v57 = vld [vmem:[#allocation5] sm:$0xff]
    %v58 = vld [vmem:[#allocation5 + $0x8] sm:$0xf]
    %v59 = vld [vmem:[#allocation5 + $0xc] sm:$0xff]
    %v60 = vld [vmem:[#allocation5 + $0x14] sm:$0xf]
    %v61 = vld [vmem:[#allocation5 + $0x18] sm:$0xff]
    %v62 = vld [vmem:[#allocation5 + $0x20] sm:$0xf]
    %v63 = vld [vmem:[#allocation5 + $0x24] sm:$0xff]
    %v64 = vld [vmem:[#allocation5 + $0x2c] sm:$0xf]
    %v65 = vld [vmem:[#allocation5 + $0x30] sm:$0xff]
    %v66 = vld [vmem:[#allocation5 + $0x38] sm:$0xf]
    %v67 = vld [vmem:[#allocation5 + $0x3c] sm:$0xff]
    %v68 = vld [vmem:[#allocation5 + $0x44] sm:$0xf]
    %v69 = vld [vmem:[#allocation5 + $0x48] sm:$0xff]
    %v70 = vld [vmem:[#allocation5 + $0x50] sm:$0xf]
    %v71 = vld [vmem:[#allocation5 + $0x54] sm:$0xff]
    %v72 = vld [vmem:[#allocation5 + $0x5c] sm:$0xf]
    %v73 = vld [vmem:[#allocation5 + $0x60] sm:$0xff]
    %v74 = vld [vmem:[#allocation5 + $0x68] sm:$0xf]
    %v75 = vld [vmem:[#allocation5 + $0x6c] sm:$0xff]
    %v76 = vld [vmem:[#allocation5 + $0x74] sm:$0xf]
    %v77 = vld [vmem:[#allocation5 + $0x78] sm:$0xff]
    %v78 = vld [vmem:[#allocation5 + $0x80] sm:$0xf]
    %v79 = vld [vmem:[#allocation5 + $0x84] sm:$0xff]
    %v80 = vld [vmem:[#allocation5 + $0x8c] sm:$0xf]
    %v81 = vld [vmem:[#allocation5 + $0x90] sm:$0xff]
    %v82 = vld [vmem:[#allocation5 + $0x98] sm:$0xf]
    %v83 = vld [vmem:[#allocation5 + $0x9c] sm:$0xff]
    %v84 = vld [vmem:[#allocation5 + $0xa4] sm:$0xf]
    %v85 = vld [vmem:[#allocation5 + $0xa8] sm:$0xff]
    %v86 = vld [vmem:[#allocation5 + $0xb0] sm:$0xf]
    %v87 = vld [vmem:[#allocation5 + $0xb4] sm:$0xff]
    %v88 = vld [vmem:[#allocation5 + $0xbc] sm:$0xf]
    %v89 = vld [vmem:[#allocation5 + $0xc0] sm:$0xff]
    %v90 = vld [vmem:[#allocation5 + $0xc8] sm:$0xf]
    %v91 = vld [vmem:[#allocation5 + $0xcc] sm:$0xff]
    %v92 = vld [vmem:[#allocation5 + $0xd4] sm:$0xf]
    %v93 = vld [vmem:[#allocation5 + $0xd8] sm:$0xff]
    %v94 = vld [vmem:[#allocation5 + $0xe0] sm:$0xf]
    %v95 = vld [vmem:[#allocation5 + $0xe4] sm:$0xff]
    %v96 = vld [vmem:[#allocation5 + $0xec] sm:$0xf]
    %v97 = vld [vmem:[#allocation5 + $0xf0] sm:$0xff]
    %v98 = vld [vmem:[#allocation5 + $0xf8] sm:$0xf]
    %v99 = vld [vmem:[#allocation5 + $0xfc] sm:$0xff]
    %v100 = vld [vmem:[#allocation5 + $0x104] sm:$0xf]
    %v101 = vld [vmem:[#allocation5 + $0x108] sm:$0xff]
    %v102 = vld [vmem:[#allocation5 + $0x110] sm:$0xf]
    %v103 = vld [vmem:[#allocation5 + $0x114] sm:$0xff]
    %v104 = vld [vmem:[#allocation5 + $0x11c] sm:$0xf]
    %v105 = vld [vmem:[#allocation5 + $0x120] sm:$0xff]
    %v106 = vld [vmem:[#allocation5 + $0x128] sm:$0xf]
    %v107 = vld [vmem:[#allocation5 + $0x12c] sm:$0xff]
    %v108 = vld [vmem:[#allocation5 + $0x134] sm:$0xf]
    %v109 = vld [vmem:[#allocation5 + $0x138] sm:$0xff]
    %v110 = vld [vmem:[#allocation5 + $0x140] sm:$0xf]
    %v111 = vld [vmem:[#allocation5 + $0x144] sm:$0xff]
    %v112 = vld [vmem:[#allocation5 + $0x14c] sm:$0xf]
    %v113 = vld [vmem:[#allocation5 + $0x150] sm:$0xff]
    %v114 = vld [vmem:[#allocation5 + $0x158] sm:$0xf]
    %v115 = vld [vmem:[#allocation5 + $0x15c] sm:$0xff]
    %v116 = vld [vmem:[#allocation5 + $0x164] sm:$0xf]
    %v117 = vld [vmem:[#allocation5 + $0x168] sm:$0xff]
    %v118 = vld [vmem:[#allocation5 + $0x170] sm:$0xf]
    %v119 = vld [vmem:[#allocation5 + $0x174] sm:$0xff]
    %v120 = vld [vmem:[#allocation5 + $0x17c] sm:$0xf]
    %v121 = vld [vmem:[%s2] sm:$0x7]
    %v123 = vlaneseq
    %v124 = vshrl.u32 %v123, 7
    %v125 = vsub.s32 0, %v124
    %v126 = vrot.slane %v121, %v125
    %v127 = vlaneseq
    %v128 = vshrl.u32 %v127, 7
    %v129 = vsub.s32 1, %v128
    %v130 = vrot.slane %v121, %v129
    %v131 = vlaneseq
    %v132 = vshrl.u32 %v131, 7
    %v133 = vsub.s32 2, %v132
    %v134 = vrot.slane %v121, %v133
    %v139 = vunpack.c.l.b16 %v56
    %v140 = vunpack.c.h.b16 %v56
    %v141 = vpack.c.b16 %v139, %v139
    %v142 = vpack.c.b16 %v140, %v140
    %v209 = vunpack.c.l.b16 %v57
    %v210 = vunpack.c.h.b16 %v57
    %v211 = vunpack.c.l.b16 %v58
    %v212 = vunpack.c.l.b16 %v59
    %v213 = vunpack.c.h.b16 %v59
    %v214 = vunpack.c.l.b16 %v60
    %v215 = vunpack.c.l.b16 %v61
    %v216 = vunpack.c.h.b16 %v61
    %v217 = vunpack.c.l.b16 %v62
    %v218 = vunpack.c.l.b16 %v63
    %v219 = vunpack.c.h.b16 %v63
    %v220 = vunpack.c.l.b16 %v64
    %v221 = vunpack.c.l.b16 %v65
    %v222 = vunpack.c.h.b16 %v65
    %v223 = vunpack.c.l.b16 %v66
    %v224 = vunpack.c.l.b16 %v67
    %v225 = vunpack.c.h.b16 %v67
    %v226 = vunpack.c.l.b16 %v68
    %v227 = vunpack.c.l.b16 %v69
    %v228 = vunpack.c.h.b16 %v69
    %v229 = vunpack.c.l.b16 %v70
    %v230 = vunpack.c.l.b16 %v71
    %v231 = vunpack.c.h.b16 %v71
    %v232 = vunpack.c.l.b16 %v72
    %v233 = vunpack.c.l.b16 %v73
    %v234 = vunpack.c.h.b16 %v73
    %v235 = vunpack.c.l.b16 %v74
    %v236 = vunpack.c.l.b16 %v75
    %v237 = vunpack.c.h.b16 %v75
    %v238 = vunpack.c.l.b16 %v76
    %v239 = vunpack.c.l.b16 %v77
    %v240 = vunpack.c.h.b16 %v77
    %v241 = vunpack.c.l.b16 %v78
    %v242 = vunpack.c.l.b16 %v79
    %v243 = vunpack.c.h.b16 %v79
    %v244 = vunpack.c.l.b16 %v80
    %v245 = vunpack.c.l.b16 %v81
    %v246 = vunpack.c.h.b16 %v81
    %v247 = vunpack.c.l.b16 %v82
    %v248 = vunpack.c.l.b16 %v83
    %v249 = vunpack.c.h.b16 %v83
    %v250 = vunpack.c.l.b16 %v84
    %v251 = vunpack.c.l.b16 %v85
    %v252 = vunpack.c.h.b16 %v85
    %v253 = vunpack.c.l.b16 %v86
    %v254 = vunpack.c.l.b16 %v87
    %v255 = vunpack.c.h.b16 %v87
    %v256 = vunpack.c.l.b16 %v88
    %v257 = vunpack.c.l.b16 %v89
    %v258 = vunpack.c.h.b16 %v89
    %v259 = vunpack.c.l.b16 %v90
    %v260 = vunpack.c.l.b16 %v91
    %v261 = vunpack.c.h.b16 %v91
    %v262 = vunpack.c.l.b16 %v92
    %v263 = vunpack.c.l.b16 %v93
    %v264 = vunpack.c.h.b16 %v93
    %v265 = vunpack.c.l.b16 %v94
    %v266 = vunpack.c.l.b16 %v95
    %v267 = vunpack.c.h.b16 %v95
    %v268 = vunpack.c.l.b16 %v96
    %v269 = vunpack.c.l.b16 %v97
    %v270 = vunpack.c.h.b16 %v97
    %v271 = vunpack.c.l.b16 %v98
    %v272 = vunpack.c.l.b16 %v99
    %v273 = vunpack.c.h.b16 %v99
    %v274 = vunpack.c.l.b16 %v100
    %v275 = vunpack.c.l.b16 %v101
    %v276 = vunpack.c.h.b16 %v101
    %v277 = vunpack.c.l.b16 %v102
    %v278 = vunpack.c.l.b16 %v103
    %v279 = vunpack.c.h.b16 %v103
    %v280 = vunpack.c.l.b16 %v104
    %v281 = vunpack.c.l.b16 %v105
    %v282 = vunpack.c.h.b16 %v105
    %v283 = vunpack.c.l.b16 %v106
    %v284 = vunpack.c.l.b16 %v107
    %v285 = vunpack.c.h.b16 %v107
    %v286 = vunpack.c.l.b16 %v108
    %v287 = vunpack.c.l.b16 %v109
    %v288 = vunpack.c.h.b16 %v109
    %v289 = vunpack.c.l.b16 %v110
    %v290 = vunpack.c.l.b16 %v111
    %v291 = vunpack.c.h.b16 %v111
    %v292 = vunpack.c.l.b16 %v112
    %v293 = vunpack.c.l.b16 %v113
    %v294 = vunpack.c.h.b16 %v113
    %v295 = vunpack.c.l.b16 %v114
    %v296 = vunpack.c.l.b16 %v115
    %v297 = vunpack.c.h.b16 %v115
    %v298 = vunpack.c.l.b16 %v116
    %v299 = vunpack.c.l.b16 %v117
    %v300 = vunpack.c.h.b16 %v117
    %v301 = vunpack.c.l.b16 %v118
    %v302 = vunpack.c.l.b16 %v119
    %v303 = vunpack.c.h.b16 %v119
    %v304 = vunpack.c.l.b16 %v120
    %v305 = vpack.c.b16 %v212, %v209
    %v306 = vpack.c.b16 %v213, %v210
    %v307 = vpack.c.b16 %v214, %v211
    %v308 = vpack.c.b16 %v218, %v215
    %v309 = vpack.c.b16 %v219, %v216
    %v310 = vpack.c.b16 %v220, %v217
    %v311 = vpack.c.b16 %v224, %v221
    %v312 = vpack.c.b16 %v225, %v222
    %v313 = vpack.c.b16 %v226, %v223
    %v314 = vpack.c.b16 %v230, %v227
    %v315 = vpack.c.b16 %v231, %v228
    %v316 = vpack.c.b16 %v232, %v229
    %v317 = vpack.c.b16 %v236, %v233
    %v318 = vpack.c.b16 %v237, %v234
    %v319 = vpack.c.b16 %v238, %v235
    %v320 = vpack.c.b16 %v242, %v239
    %v321 = vpack.c.b16 %v243, %v240
    %v322 = vpack.c.b16 %v244, %v241
    %v323 = vpack.c.b16 %v248, %v245
    %v324 = vpack.c.b16 %v249, %v246
    %v325 = vpack.c.b16 %v250, %v247
    %v326 = vpack.c.b16 %v254, %v251
    %v327 = vpack.c.b16 %v255, %v252
    %v328 = vpack.c.b16 %v256, %v253
    %v329 = vpack.c.b16 %v260, %v257
    %v330 = vpack.c.b16 %v261, %v258
    %v331 = vpack.c.b16 %v262, %v259
    %v332 = vpack.c.b16 %v266, %v263
    %v333 = vpack.c.b16 %v267, %v264
    %v334 = vpack.c.b16 %v268, %v265
    %v335 = vpack.c.b16 %v272, %v269
    %v336 = vpack.c.b16 %v273, %v270
    %v337 = vpack.c.b16 %v274, %v271
    %v338 = vpack.c.b16 %v278, %v275
    %v339 = vpack.c.b16 %v279, %v276
    %v340 = vpack.c.b16 %v280, %v277
    %v341 = vpack.c.b16 %v284, %v281
    %v342 = vpack.c.b16 %v285, %v282
    %v343 = vpack.c.b16 %v286, %v283
    %v344 = vpack.c.b16 %v290, %v287
    %v345 = vpack.c.b16 %v291, %v288
    %v346 = vpack.c.b16 %v292, %v289
    %v347 = vpack.c.b16 %v296, %v293
    %v348 = vpack.c.b16 %v297, %v294
    %v349 = vpack.c.b16 %v298, %v295
    %v350 = vpack.c.b16 %v302, %v299
    %v351 = vpack.c.b16 %v303, %v300
    %v352 = vpack.c.b16 %v304, %v301
    %401 = vmatprep.subr.bf16.mxu0 %v327
    %402 = vmatpush1.bf16.msra.mxu0 %v326
    %403 = vmatprep.subr.bf16.mxu0 %v324
    %404 = vmatpush1.bf16.msra.mxu0 %v323
    %405 = vmatprep.subr.bf16.mxu0 %v321
    %406 = vmatpush1.bf16.msra.mxu0 %v320
    %407 = vmatprep.subr.bf16.mxu0 %v318
    %408 = vmatpush1.bf16.msra.mxu0 %v317
    %409 = vmatprep.subr.bf16.mxu0 %v315
    %410 = vmatpush1.bf16.msra.mxu0 %v314
    %411 = vmatprep.subr.bf16.mxu0 %v312
    %412 = vmatpush1.bf16.msra.mxu0 %v311
    %413 = vmatprep.subr.bf16.mxu0 %v309
    %414 = vmatpush1.bf16.msra.mxu0 %v308
    %415 = vmatprep.subr.bf16.mxu0 %v306
    %416 = vmatpush1.bf16.msra.mxu0 %v305
    %417 = vmatprep.subr.bf16.mxu0 %v351
    %418 = vmatpush2.bf16.msra.mxu0 %v350
    %419 = vmatprep.subr.bf16.mxu0 %v348
    %420 = vmatpush2.bf16.msra.mxu0 %v347
    %421 = vmatprep.subr.bf16.mxu0 %v345
    %422 = vmatpush2.bf16.msra.mxu0 %v344
    %423 = vmatprep.subr.bf16.mxu0 %v342
    %424 = vmatpush2.bf16.msra.mxu0 %v341
    %425 = vmatprep.subr.bf16.mxu0 %v339
    %426 = vmatpush2.bf16.msra.mxu0 %v338
    %427 = vmatprep.subr.bf16.mxu0 %v336
    %428 = vmatpush2.bf16.msra.mxu0 %v335
    %429 = vmatprep.subr.bf16.mxu0 %v333
    %430 = vmatpush2.bf16.msra.mxu0 %v332
    %431 = vmatprep.subr.bf16.mxu0 %v330
    %432 = vmatpush2.bf16.msra.mxu0 %v329
    %433 = vmatprep.mubr.bf16.mxu0 %v142
    %434 = vmatmul.mubr.bf16.gmra.mxu0 %v141
    %v435 = vpop.f32.mrf.mxu0
    %v436 = vadd.f32 %v126, %v435
    %v437 = vpop.f32.mrf.mxu0
    %v438 = vadd.f32 %v130, %v437
    %v439 = vpop.f32.mrf.mxu0
    %v440 = vpop.f32.mrf.mxu0
    %441 = vdwg.mxu0
    %442 = vmatprep.subr.bf16.mxu0 0
    %443 = vmatpush1.bf16.msra.mxu0 %v328
    %444 = vmatprep.subr.bf16.mxu0 0
    %445 = vmatpush1.bf16.msra.mxu0 %v325
    %446 = vmatprep.subr.bf16.mxu0 0
    %447 = vmatpush1.bf16.msra.mxu0 %v322
    %448 = vmatprep.subr.bf16.mxu0 0
    %449 = vmatpush1.bf16.msra.mxu0 %v319
    %450 = vmatprep.subr.bf16.mxu0 0
    %451 = vmatpush1.bf16.msra.mxu0 %v316
    %452 = vmatprep.subr.bf16.mxu0 0
    %453 = vmatpush1.bf16.msra.mxu0 %v313
    %454 = vmatprep.subr.bf16.mxu0 0
    %455 = vmatpush1.bf16.msra.mxu0 %v310
    %456 = vmatprep.subr.bf16.mxu0 0
    %457 = vmatpush1.bf16.msra.mxu0 %v307
    %458 = vmatprep.subr.bf16.mxu0 0
    %459 = vmatpush2.bf16.msra.mxu0 %v352
    %460 = vmatprep.subr.bf16.mxu0 0
    %461 = vmatpush2.bf16.msra.mxu0 %v349
    %462 = vmatprep.subr.bf16.mxu0 0
    %463 = vmatpush2.bf16.msra.mxu0 %v346
    %464 = vmatprep.subr.bf16.mxu0 0
    %465 = vmatpush2.bf16.msra.mxu0 %v343
    %466 = vmatprep.subr.bf16.mxu0 0
    %467 = vmatpush2.bf16.msra.mxu0 %v340
    %468 = vmatprep.subr.bf16.mxu0 0
    %469 = vmatpush2.bf16.msra.mxu0 %v337
    %470 = vmatprep.subr.bf16.mxu0 0
    %471 = vmatpush2.bf16.msra.mxu0 %v334
    %472 = vmatprep.subr.bf16.mxu0 0
    %473 = vmatpush2.bf16.msra.mxu0 %v331
    %474 = vmatprep.mubr.bf16.mxu0 %v142
    %475 = vmatmul.mubr.bf16.gmra.mxu0 %v141
    %v476 = vpop.f32.mrf.mxu0
    %v477 = vadd.f32 %v134, %v476
    %v478 = vpop.f32.mrf.mxu0
    %v479 = vpop.f32.mrf.mxu0
    %v480 = vpop.f32.mrf.mxu0
    %481 = vdwg.mxu0
    %v482 = vmax.f32 %v436, 0.0
    %v483 = vmax.f32 %v438, 0.0
    %v484 = vmax.f32 %v477, 0.0
    %v485 = vrsqrt.pop %v482
    %v486 = vmul.f32 %v482, %v485
    %vm487 = vcmp.eq.f32.partialorder %v482, inf
    %v488 = vsel %vm487, %v482, %v486
    %vm489 = vcmp.eq.f32.partialorder %v482, 0.0
    %v490 = vand.u32 %v482, 2147483648
    %v491 = vsel %vm489, %v490, %v488
    %v492 = vrsqrt.pop %v483
    %v493 = vmul.f32 %v483, %v492
    %vm494 = vcmp.eq.f32.partialorder %v483, inf
    %v495 = vsel %vm494, %v483, %v493
    %vm496 = vcmp.eq.f32.partialorder %v483, 0.0
    %v497 = vand.u32 %v483, 2147483648
    %v498 = vsel %vm496, %v497, %v495
    %v499 = vrsqrt.pop %v484
    %v500 = vmul.f32 %v484, %v499
    %vm501 = vcmp.eq.f32.partialorder %v484, inf
    %v502 = vsel %vm501, %v484, %v500
    %vm503 = vcmp.eq.f32.partialorder %v484, 0.0
    %v504 = vand.u32 %v484, 2147483648
    %v505 = vsel %vm503, %v504, %v502
    %v506 = vld [vmem:[#allocation7] sm:$0xff]
    %v507 = vld [vmem:[#allocation7 + $0x8] sm:$0xff]
    %v508 = vld [vmem:[#allocation7 + $0x10] sm:$0xff]
    %v509 = vmul.f32 %v491, %v506
    %v510 = vmul.f32 %v498, %v507
    %v511 = vmul.f32 %v505, %v508
    %v512 = vadd.f32 %v482, %v509
    %v513 = vadd.f32 %v483, %v510
    %v514 = vadd.f32 %v484, %v511
    %515 = vst [vmem:[#allocation8] sm:$0xff] %v512
    %516 = vst [vmem:[#allocation8 + $0x8] sm:$0xff] %v513
    %517 = vst [vmem:[#allocation8 + $0x10] sm:$0xff] %v514
    // Predicated region
    $region30: #{tpu_custom_call.1} parent=1 // pred_check
      _
    $region31: #{tpu_custom_call.1} parent=1 // pred_check_branch
      %519 = sbr.rel (0) target = $region33
    $region32: #{tpu_custom_call.1} parent=1 // pred_region
      %s521 = ssub.s32 384, 384
      %522 = vsyncadd [#allocation4], %s521
      %s524 = sshll.u32 [#allocation8], 4
      %s525 = int_to_ptr.vmem [resolvable:$true] %s524
      %527 = dma.vmem_to_hbm [thread:$0]  %s525, 384, %s4, [#allocation4]
    $region33: #{tpu_custom_call.1} parent=1 // pred_fallthru
      _
    // Predicated region
    $region34: #{tpu_custom_call.1} parent=1 // pred_check
      _
    $region35: #{tpu_custom_call.1} parent=1 // pred_check_branch
      %529 = sbr.rel (0) target = $region37
    $region36: #{tpu_custom_call.1} parent=1 // pred_region
      %530 = dma.done [#allocation4], 384
    $region37: #{tpu_custom_call.1} parent=1 // pred_fallthru
      _
    %531 = vsyncpa [#allocation3], 1
    %532 = vsyncpa [#allocation6], 1
    %533 = vsyncpa [#allocation4], 1

</llo_original>
